<compile_context>
chip_gen: v6e
topology: v6e:2x2x1
jax: 0.10.0
libtpu: 0.0.40
codegen_flags: <defaults>
</compile_context>

<pallas_src>
import functools

import jax
import jax.numpy as jnp
from jax import lax
from jax.experimental import pallas as pl
from jax.experimental.pallas import tpu as pltpu

LANES = 128
SUBL = 8
N_SPLIT = 2  # leading "parallel" grid axis -> megacore sharding on v7x


def _round_up(x, m):
    return ((x + m - 1) // m) * m


def _make_snr_kernel(rows, block_rows, blocks_per_core, need_mask):
    """Build the kernel with statically-baked row count / tile / split / masking."""

    def kernel(t_ref, p_ref, out_t_ref, out_n_ref):
        c = pl.program_id(0)   # core-split index ("parallel")
        i = pl.program_id(1)   # block index within this core ("arbitrary")

        @pl.when(i == 0)
        def _init():
            out_t_ref[...] = jnp.zeros_like(out_t_ref)
            out_n_ref[...] = jnp.zeros_like(out_n_ref)

        t = t_ref[...].astype(jnp.float32)
        n = t - p_ref[...].astype(jnp.float32)
        tsq = t * t
        nsq = n * n

        if need_mask:
            # Only tail / redundant (index-clamped) blocks have out-of-range
            # rows; the compare is all-True elsewhere and hides under the DMA.
            g = c * blocks_per_core + i            # global block id
            row_ids = g * block_rows + lax.broadcasted_iota(
                jnp.int32, (block_rows, LANES), 0
            )
            valid = row_ids < rows
            tsq = jnp.where(valid, tsq, 0.0)
            nsq = jnp.where(valid, nsq, 0.0)

        # Fold (block_rows, 128) -> (8, 128): vreg-aligned, pure VPU adds into
        # the per-core resident output blocks (no XLU, no SMEM scalars).
        out_t_ref[...] += jnp.sum(tsq.reshape(-1, SUBL, LANES), axis=0)
        out_n_ref[...] += jnp.sum(nsq.reshape(-1, SUBL, LANES), axis=0)

    return kernel


@functools.partial(jax.jit, static_argnames=("row_tile",))
def snr_loss(s_target, s_pred, *, row_tile=1024):
    assert s_target.shape == s_pred.shape, "shape mismatch"

    dtype = jnp.promote_types(s_target.dtype, s_pred.dtype)
    if not jnp.issubdtype(dtype, jnp.floating):
        dtype = jnp.float32
    t = s_target.reshape(-1).astype(dtype)   # native dtype streamed (no f32 upcast)
    p = s_pred.reshape(-1).astype(dtype)

    itemsize = jnp.dtype(dtype).itemsize
    packing = max(1, 4 // itemsize)          # 1 (f32), 2 (bf16/f16)
    sub_mult = SUBL * packing                # sublane multiple for this dtype
    align = sub_mult * LANES                 # one native (sublane, lane) tile

    n = t.shape[0]
    n_pad = _round_up(n, align)
    if n_pad != n:
        # Zero padding contributes 0 to both sums-of-squares -> exact result.
        # Only the (rare) unaligned case pays this copy; block alignment is
        # handled by in-kernel masking, not padding.
        t = jnp.pad(t, (0, n_pad - n))
        p = jnp.pad(p, (0, n_pad - n))

    rows = n_pad // LANES
    t2 = t.reshape(rows, LANES)
    p2 = p.reshape(rows, LANES)

    row_tile = max(int(row_tile), 1)
    block_rows = min(_round_up(row_tile, sub_mult), rows)
    n_blocks = pl.cdiv(rows, block_rows)

    # Split the block range across cores (only matters on v7x megacore; at
    # most one redundant fully-masked block elsewhere).
    n_split = N_SPLIT if n_blocks >= N_SPLIT else 1
    bpc = pl.cdiv(n_blocks, n_split)                 # blocks per core
    total_blocks = n_split * bpc
    need_mask = (total_blocks * block_rows) != rows

    if total_blocks == n_blocks:
        in_idx = lambda c, i: (c * bpc + i, 0)
    else:
        # Redundant trailing blocks re-read the last valid block (kept fully
        # in-bounds for the DMA) and are zeroed by the in-kernel mask.
        last_block = n_blocks - 1
        in_idx = lambda c, i: (jnp.minimum(c * bpc + i, last_block), 0)

    # VMEM budget: 2 inputs x 2 pipeline buffers x tile.  Default tile
    # (1024 x 128 f32 = 512 KiB) fits every generation's default scoped VMEM
    # (v5e 16 MiB / v6e 32 MiB / v7x 32 MiB); only raise the limit when
    # sweeping much larger tiles, and keep headroom under v7x's 64 MiB.
    tile_bytes = block_rows * LANES * itemsize
    est_vmem = 4 * tile_bytes + (1 << 20)
    vmem_limit = None
    if est_vmem > (12 << 20):
        vmem_limit = min(est_vmem + (4 << 20), 56 << 20)

    kernel = _make_snr_kernel(rows, block_rows, bpc, need_mask)

    part_t, part_n = pl.pallas_call(
        kernel,
        out_shape=(
            jax.ShapeDtypeStruct((n_split, SUBL, LANES), jnp.float32),
            jax.ShapeDtypeStruct((n_split, SUBL, LANES), jnp.float32),
        ),
        grid_spec=pltpu.PrefetchScalarGridSpec(
            num_scalar_prefetch=0,
            grid=(n_split, bpc),
            in_specs=[
                pl.BlockSpec((block_rows, LANES), in_idx),
                pl.BlockSpec((block_rows, LANES), in_idx),
            ],
            out_specs=(
                pl.BlockSpec((None, SUBL, LANES), lambda c, i: (c, 0, 0)),
                pl.BlockSpec((None, SUBL, LANES), lambda c, i: (c, 0, 0)),
            ),
        ),
        compiler_params=pltpu.CompilerParams(
            dimension_semantics=("parallel", "arbitrary"),
            vmem_limit_bytes=vmem_limit,
        ),
    )(t2, p2)

    # Tiny final combine (a few hundred f32 adds + divide + log10) in XLA.
    t_sum = jnp.sum(part_t)
    n_sum = jnp.sum(part_n)
    # Matches torch semantics: zero noise -> inf -> loss = -inf.
    return -(10.0 * jnp.log10(t_sum / n_sum))


def snr_loss_ref(s_target, s_pred):
    t = s_target.astype(jnp.float32)
    noise = t - s_pred.astype(jnp.float32)
    snr = 10.0 * jnp.log10(jnp.sum(t ** 2) / jnp.sum(noise ** 2))
    return -snr


if __name__ == "__main__":
    key = jax.random.PRNGKey(0)
    k1, k2 = jax.random.split(key)

    # 1) Small audio-like shapes: batch=2, channels=4, time=512 (single block).
    s_target = jax.random.normal(k1, (2, 4, 512), dtype=jnp.float32)
    s_pred = s_target + 0.1 * jax.random.normal(k2, (2, 4, 512), dtype=jnp.float32)
    loss = snr_loss(s_target, s_pred)
    jax.block_until_ready(loss)
    ref = snr_loss_ref(s_target, s_pred)
    assert jnp.allclose(loss, ref, rtol=1e-5, atol=1e-5), (loss, ref)

    # 2) Unaligned element count + small tile: multi-block accumulation across
    #    the 2-way core split plus the in-kernel tail mask (no block padding).
    k3, k4 = jax.random.split(k2)
    a = jax.random.normal(k3, (3, 5, 700), dtype=jnp.float32)
    b = a + 0.05 * jax.random.normal(k4, (3, 5, 700), dtype=jnp.float32)
    loss2 = snr_loss(a, b, row_tile=16)
    jax.block_until_ready(loss2)
    ref2 = snr_loss_ref(a, b)
    assert jnp.allclose(loss2, ref2, rtol=1e-5, atol=1e-5), (loss2, ref2)

    # 3) Odd block count: exercises the clamped (redundant, fully-masked)
    #    trailing block on the second core-split slice.
    k5, k6 = jax.random.split(k4)
    c = jax.random.normal(k5, (2, 40, 128), dtype=jnp.float32)
    d = c + 0.2 * jax.random.normal(k6, (2, 40, 128), dtype=jnp.float32)
    loss3 = snr_loss(c, d, row_tile=16)
    jax.block_until_ready(loss3)
    ref3 = snr_loss_ref(c, d)
    assert jnp.allclose(loss3, ref3, rtol=1e-5, atol=1e-5), (loss3, ref3)

    # 4) bf16 inputs: exercises the packed (sublane multiple = 16) path.
    k7, k8 = jax.random.split(k6)
    e32 = jax.random.normal(k7, (2, 4, 1000), dtype=jnp.float32)
    f32_ = e32 + 0.1 * jax.random.normal(k8, (2, 4, 1000), dtype=jnp.float32)
    e = e32.astype(jnp.bfloat16)
    f = f32_.astype(jnp.bfloat16)
    loss4 = snr_loss(e, f)
    jax.block_until_ready(loss4)
    ref4 = snr_loss_ref(e, f)
    assert jnp.allclose(loss4, ref4, rtol=1e-4, atol=1e-4), (loss4, ref4)

    print("KERNEL_OK")
</pallas_src>

<mosaic_0001>
module attributes {stable_mosaic.version = 11 : i64} {
  func.func @kernel(%arg0: i32, %arg1: i32, %arg2: memref<32x128xf32, #tpu.memory_space<vmem>>, %arg3: memref<32x128xf32, #tpu.memory_space<vmem>>, %arg4: memref<1x8x128xf32, #tpu.memory_space<vmem>>, %arg5: memref<1x8x128xf32, #tpu.memory_space<vmem>>) attributes {dimension_semantics = [#tpu.dimension_semantics<parallel>, #tpu.dimension_semantics<arbitrary>], iteration_bounds = array<i64: 1, 1>, scalar_prefetch = 0 : i64, scratch_operands = 0 : i64, tpu.core_type = #tpu.core_type<tc>, window_params = [{transform_indices = @transform_0, window_bounds = array<i64: 32, 128>}, {transform_indices = @transform_1, window_bounds = array<i64: 32, 128>}, {transform_indices = @transform_2, window_bounds = array<i64: 1, 8, 128>}, {transform_indices = @transform_3, window_bounds = array<i64: 1, 8, 128>}]} {
    %c0_i32 = arith.constant 0 : i32
    %0 = arith.cmpi eq, %arg1, %c0_i32 : i32
    %1 = arith.extui %0 : i1 to i32
    %c0_i32_0 = arith.constant 0 : i32
    %2 = arith.cmpi ne, %1, %c0_i32_0 : i32
    scf.if %2 {
      %cst_17 = arith.constant 0.000000e+00 : f32
      %24 = vector.broadcast %cst_17 : f32 to vector<8x128xf32>
      %c0_18 = arith.constant 0 : index
      %c0_19 = arith.constant 0 : index
      %c0_20 = arith.constant 0 : index
      %25 = vector.load %arg4[%c0_18, %c0_19, %c0_20] : memref<1x8x128xf32, #tpu.memory_space<vmem>>, vector<1x8x128xf32>
      %26 = vector.shape_cast %25 : vector<1x8x128xf32> to vector<8x128xf32>
      %27 = vector.shape_cast %24 : vector<8x128xf32> to vector<1x8x128xf32>
      tpu.vector_store %arg4[%c0_18, %c0_19, %c0_20], %27 {strides = array<i32>} : memref<1x8x128xf32, #tpu.memory_space<vmem>>, vector<1x8x128xf32>,
      %cst_21 = arith.constant 0.000000e+00 : f32
      %28 = vector.broadcast %cst_21 : f32 to vector<8x128xf32>
      %c0_22 = arith.constant 0 : index
      %c0_23 = arith.constant 0 : index
      %c0_24 = arith.constant 0 : index
      %29 = vector.load %arg5[%c0_22, %c0_23, %c0_24] : memref<1x8x128xf32, #tpu.memory_space<vmem>>, vector<1x8x128xf32>
      %30 = vector.shape_cast %29 : vector<1x8x128xf32> to vector<8x128xf32>
      %31 = vector.shape_cast %28 : vector<8x128xf32> to vector<1x8x128xf32>
      tpu.vector_store %arg5[%c0_22, %c0_23, %c0_24], %31 {strides = array<i32>} : memref<1x8x128xf32, #tpu.memory_space<vmem>>, vector<1x8x128xf32>,
    } else {
    }
    %c0 = arith.constant 0 : index
    %c0_1 = arith.constant 0 : index
    %3 = vector.load %arg2[%c0, %c0_1] : memref<32x128xf32, #tpu.memory_space<vmem>>, vector<32x128xf32>
    %c0_2 = arith.constant 0 : index
    %c0_3 = arith.constant 0 : index
    %4 = vector.load %arg3[%c0_2, %c0_3] : memref<32x128xf32, #tpu.memory_space<vmem>>, vector<32x128xf32>
    %5 = arith.subf %3, %4 : vector<32x128xf32>
    %6 = arith.mulf %3, %3 : vector<32x128xf32>
    %7 = arith.mulf %5, %5 : vector<32x128xf32>
    %c0_4 = arith.constant 0 : index
    %c0_5 = arith.constant 0 : index
    %c0_6 = arith.constant 0 : index
    %8 = vector.load %arg4[%c0_4, %c0_5, %c0_6] : memref<1x8x128xf32, #tpu.memory_space<vmem>>, vector<1x8x128xf32>
    %9 = vector.shape_cast %8 : vector<1x8x128xf32> to vector<8x128xf32>
    %10 = vector.shape_cast %6 : vector<32x128xf32> to vector<4x8x128xf32>
    %cst = arith.constant dense<0.000000e+00> : vector<8x128xf32>
    %11 = vector.multi_reduction <add>, %10, %cst [0] : vector<4x8x128xf32> to vector<8x128xf32>
    %12 = arith.addf %9, %11 : vector<8x128xf32>
    %c0_7 = arith.constant 0 : index
    %c0_8 = arith.constant 0 : index
    %c0_9 = arith.constant 0 : index
    %13 = vector.load %arg4[%c0_7, %c0_8, %c0_9] : memref<1x8x128xf32, #tpu.memory_space<vmem>>, vector<1x8x128xf32>
    %14 = vector.shape_cast %13 : vector<1x8x128xf32> to vector<8x128xf32>
    %15 = vector.shape_cast %12 : vector<8x128xf32> to vector<1x8x128xf32>
    tpu.vector_store %arg4[%c0_7, %c0_8, %c0_9], %15 {strides = array<i32>} : memref<1x8x128xf32, #tpu.memory_space<vmem>>, vector<1x8x128xf32>,
    %c0_10 = arith.constant 0 : index
    %c0_11 = arith.constant 0 : index
    %c0_12 = arith.constant 0 : index
    %16 = vector.load %arg5[%c0_10, %c0_11, %c0_12] : memref<1x8x128xf32, #tpu.memory_space<vmem>>, vector<1x8x128xf32>
    %17 = vector.shape_cast %16 : vector<1x8x128xf32> to vector<8x128xf32>
    %18 = vector.shape_cast %7 : vector<32x128xf32> to vector<4x8x128xf32>
    %cst_13 = arith.constant dense<0.000000e+00> : vector<8x128xf32>
    %19 = vector.multi_reduction <add>, %18, %cst_13 [0] : vector<4x8x128xf32> to vector<8x128xf32>
    %20 = arith.addf %17, %19 : vector<8x128xf32>
    %c0_14 = arith.constant 0 : index
    %c0_15 = arith.constant 0 : index
    %c0_16 = arith.constant 0 : index
    %21 = vector.load %arg5[%c0_14, %c0_15, %c0_16] : memref<1x8x128xf32, #tpu.memory_space<vmem>>, vector<1x8x128xf32>
    %22 = vector.shape_cast %21 : vector<1x8x128xf32> to vector<8x128xf32>
    %23 = vector.shape_cast %20 : vector<8x128xf32> to vector<1x8x128xf32>
    tpu.vector_store %arg5[%c0_14, %c0_15, %c0_16], %23 {strides = array<i32>} : memref<1x8x128xf32, #tpu.memory_space<vmem>>, vector<1x8x128xf32>,
    return
  }
  func.func @transform_0(%arg0: i32, %arg1: i32) -> (i32, i32) {
    %c1_i32 = arith.constant 1 : i32
    %0 = arith.muli %arg0, %c1_i32 : i32
    %1 = arith.addi %0, %arg1 : i32
    %c0_i32 = arith.constant 0 : i32
    %c0_i32_0 = arith.constant 0 : i32
    return %1, %c0_i32 : i32, i32
  }
  func.func @transform_1(%arg0: i32, %arg1: i32) -> (i32, i32) {
    %c1_i32 = arith.constant 1 : i32
    %0 = arith.muli %arg0, %c1_i32 : i32
    %1 = arith.addi %0, %arg1 : i32
    %c0_i32 = arith.constant 0 : i32
    %c0_i32_0 = arith.constant 0 : i32
    return %1, %c0_i32 : i32, i32
  }
  func.func @transform_2(%arg0: i32, %arg1: i32) -> (i32, i32, i32) {
    %c0_i32 = arith.constant 0 : i32
    %c0_i32_0 = arith.constant 0 : i32
    %c0_i32_1 = arith.constant 0 : i32
    return %arg0, %c0_i32, %c0_i32_0 : i32, i32, i32
  }
  func.func @transform_3(%arg0: i32, %arg1: i32) -> (i32, i32, i32) {
    %c0_i32 = arith.constant 0 : i32
    %c0_i32_0 = arith.constant 0 : i32
    %c0_i32_1 = arith.constant 0 : i32
    return %arg0, %c0_i32, %c0_i32_0 : i32, i32, i32
  }
}

</mosaic_0001>

<llo_original>
// kernel: snr_loss.1
$region0: #{snr_loss.1}
  #allocation0 [shape = 'u32[]', space=smem, size = 0x4, offset = 0x4, fixed_abs, tag = 'smem constant byte address 0x4 - core index']
  #allocation1 [shape = 'u32[144,128]{1,0:T(1,128)}', space=vmem, size = 0x12000, scoped, tag = 'internal scratch']
  %s0 = inlined_call_operand.vmem [shape: f32[32,128], index: 0, kind: input, shape index: {}]
  %s1 = inlined_call_operand.vmem [shape: f32[32,128], index: 1, kind: input, shape index: {}]
  %s2 = inlined_call_operand.vmem [shape: f32[1,8,128], index: 2, kind: output, shape index: {0}]
  %s3 = inlined_call_operand.vmem [shape: f32[1,8,128], index: 3, kind: output, shape index: {1}]
  %4 = xla_tuple %s2, %s3
  %s5 = sld [smem:[#allocation0]]
  $region30: #{snr_loss.1} parent=0
    _
  %s7 = ssub.s32 1, %s5
  %s8 = scalar_select 0, %s7, %s5
  // Predicated region
  $region2: #{snr_loss.1} parent=0 // pred_check
    _
  $region3: #{snr_loss.1} parent=0 // pred_check_branch
    %10 = sbr.rel (0) target = $region5
  $region4: #{snr_loss.1} parent=0 // pred_region
    %s11 = sadd.s32 0, 0
    %s12 = smul.u32 4, %s11
    %p13 = scmp.lt.s32.totalorder %s12, 3
    %s14 = scalar_select %p13, %s12, 3
    %s15 = smul.addr %s14, 8
    %s16 = scalar_lea.vmem %s0, %s15
    %s17 = sadd.s32 0, 0
    %s18 = smul.u32 4, %s17
  $region5: #{snr_loss.1} parent=0 // pred_fallthru
    _
  // Predicated region
  $region6: #{snr_loss.1} parent=0 // pred_check
    _
  $region7: #{snr_loss.1} parent=0 // pred_check_branch
    %20 = sbr.rel (0) target = $region9
  $region8: #{snr_loss.1} parent=0 // pred_region
    %s21 = sadd.s32 0, 0
    %s22 = smul.u32 4, %s21
    %p23 = scmp.lt.s32.totalorder %s22, 3
    %s24 = scalar_select %p23, %s22, 3
    %s25 = smul.addr %s24, 8
    %s26 = scalar_lea.vmem %s1, %s25
    %s27 = sadd.s32 0, 0
    %s28 = smul.u32 4, %s27
  $region9: #{snr_loss.1} parent=0 // pred_fallthru
    _
  %s29 = sadd.s32 0, 0
  %s30 = smul.u32 4, %s29
  %p31 = scmp.lt.s32.totalorder %s30, 3
  %s32 = scalar_select %p31, %s30, 3
  %s33 = smul.addr %s32, 8
  %s34 = scalar_lea.vmem %s0, %s33
  %s35 = sadd.s32 0, 0
  %s36 = smul.u32 4, %s35
  %p37 = scmp.lt.s32.totalorder %s36, 3
  %s38 = scalar_select %p37, %s36, 3
  %s39 = smul.addr %s38, 8
  %s40 = scalar_lea.vmem %s1, %s39
  %s41 = sadd.s32 0, 0
  %s42 = smul.u32 4, %s41
  %p43 = scmp.lt.s32.totalorder %s42, 3
  %s44 = scalar_select %p43, %s42, 3
  %s45 = smul.addr %s44, 8
  %s46 = scalar_lea.vmem %s0, %s45
  %s47 = sadd.s32 0, 0
  %s48 = smul.u32 4, %s47
  %s49 = sadd.s32 0, 0
  %s50 = smul.u32 4, %s49
  %p51 = scmp.lt.s32.totalorder %s50, 3
  %s52 = scalar_select %p51, %s50, 3
  %s53 = smul.addr %s52, 8
  %s54 = scalar_lea.vmem %s1, %s53
  %s55 = sadd.s32 0, 0
  %s56 = smul.u32 4, %s55
  %p57 = scmp.eq.s32.totalorder 0, 0
  // Predicated region
  $region10: #{snr_loss.1} parent=0 // pred_check
    %p58 = pneg %p57
  $region11: #{snr_loss.1} parent=0 // pred_check_branch
    %60 = sbr.rel (%p58) target = $region13
  $region12: #{snr_loss.1} parent=0 // pred_region
    %61 = vst [vmem:[%s2] sm:$0xff] 0.0
    %62 = vst [vmem:[%s3] sm:$0xff] 0.0
  $region13: #{snr_loss.1} parent=0 // pred_fallthru
    _
  %v63 = vld [vmem:[%s46] sm:$0xff]
  %v64 = vld [vmem:[%s46 + $0x8] sm:$0xff]
  %v65 = vld [vmem:[%s46 + $0x10] sm:$0xff]
  %v66 = vld [vmem:[%s46 + $0x18] sm:$0xff]
  %v67 = vld [vmem:[%s54] sm:$0xff]
  %v68 = vld [vmem:[%s54 + $0x8] sm:$0xff]
  %v69 = vld [vmem:[%s54 + $0x10] sm:$0xff]
  %v70 = vld [vmem:[%s54 + $0x18] sm:$0xff]
  %v71 = vsub.f32 %v63, %v67
  %v72 = vsub.f32 %v64, %v68
  %v73 = vsub.f32 %v65, %v69
  %v74 = vsub.f32 %v66, %v70
  %v75 = vmul.f32 %v63, %v63
  %v76 = vmul.f32 %v64, %v64
  %v77 = vmul.f32 %v65, %v65
  %v78 = vmul.f32 %v66, %v66
  %v79 = vmul.f32 %v71, %v71
  %v80 = vmul.f32 %v72, %v72
  %v81 = vmul.f32 %v73, %v73
  %v82 = vmul.f32 %v74, %v74
  %v83 = vld [vmem:[%s2] sm:$0xff]
  %v84 = vadd.f32 %v75, %v76
  %v85 = vadd.f32 %v84, %v77
  %v86 = vadd.f32 %v85, %v78
  %v87 = vadd.f32 %v83, %v86
  %88 = vst [vmem:[%s2] sm:$0xff] %v87
  %v89 = vld [vmem:[%s3] sm:$0xff]
  %v90 = vadd.f32 %v79, %v80
  %v91 = vadd.f32 %v90, %v81
  %v92 = vadd.f32 %v91, %v82
  %v93 = vadd.f32 %v89, %v92
  %94 = vst [vmem:[%s3] sm:$0xff] %v93
  // Predicated region
  $region14: #{snr_loss.1} parent=0 // pred_check
    _
  $region15: #{snr_loss.1} parent=0 // pred_check_branch
    %96 = sbr.rel (0) target = $region17
  $region16: #{snr_loss.1} parent=0 // pred_region
    _
  $region17: #{snr_loss.1} parent=0 // pred_fallthru
    _
  // Predicated region
  $region18: #{snr_loss.1} parent=0 // pred_check
    _
  $region19: #{snr_loss.1} parent=0 // pred_check_branch
    %98 = sbr.rel (0) target = $region21
  $region20: #{snr_loss.1} parent=0 // pred_region
    _
  $region21: #{snr_loss.1} parent=0 // pred_fallthru
    _
  // Predicated region
  $region22: #{snr_loss.1} parent=0 // pred_check
    _
  $region23: #{snr_loss.1} parent=0 // pred_check_branch
    %100 = sbr.rel (0) target = $region25
  $region24: #{snr_loss.1} parent=0 // pred_region
    _
  $region25: #{snr_loss.1} parent=0 // pred_fallthru
    _
  // Predicated region
  $region26: #{snr_loss.1} parent=0 // pred_check
    _
  $region27: #{snr_loss.1} parent=0 // pred_check_branch
    %102 = sbr.rel (0) target = $region29
  $region28: #{snr_loss.1} parent=0 // pred_region
    _
  $region29: #{snr_loss.1} parent=0 // pred_fallthru
    _

</llo_original>
